<compile_context>
chip_gen: v5e
topology: v5e:2x2
jax: 0.10.0
libtpu: 0.0.40
codegen_flags: <defaults>
</compile_context>

<pallas_src>
import jax
import jax.numpy as jnp
from jax.experimental import pallas as pl
from jax.experimental.pallas import tpu as pltpu


def _node2vec_fwd_kernel(emb_ref, feats_ref, w_ref, b_ref, out_ref):
    # emb_ref:   (TN, D)      embedding rows for this tile
    # feats_ref: (TN, F)      node features for this tile
    # w_ref:     (F,  E)      lin_node weight transposed (W.T), grid-resident
    # b_ref:     (1,  E)      lin_node bias, grid-resident
    # out_ref:   (TN, D + E)  concatenated output rows
    d = emb_ref.shape[1]
    e = w_ref.shape[1]
    # Direct sub-slice stores -- no lane-axis concatenate temporary, no
    # redundant dtype casts (everything is f32).
    out_ref[:, :d] = emb_ref[...]
    z = jnp.dot(feats_ref[...], w_ref[...],
                preferred_element_type=jnp.float32) + b_ref[...]
    out_ref[:, d:d + e] = z


def _round_up(x, m):
    return (x + m - 1) // m * m


def _choose_tile_n(n_rows, d, f, out_w):
    """Largest row tile (multiple of 8) whose double-buffered tiles fit well
    inside the scoped-VMEM budget, while keeping >=2 grid steps if possible."""
    budget_bytes = 12 * 1024 * 1024              # headroom under 32 MiB limit
    bytes_per_row = 4 * (d + f + out_w) * 2      # f32, double-buffered in/out
    t = min(2048, max(8, budget_bytes // bytes_per_row))
    t = max(8, (t // 8) * 8)
    rows8 = _round_up(max(n_rows, 1), 8)
    t = min(t, rows8)
    # Prefer >= 2 grid steps so the "parallel" row axis can shard across the
    # two TensorCores on v7x (harmless on single-TC v5e / v6e).
    if rows8 > 8:
        half = _round_up((rows8 + 1) // 2, 8)
        t = min(t, half)
    return max(t, 8)


def node2vec_forward(emb_weight, node_feats, lin_w, lin_b, batch=None, *,
                     tile_n=None):
    """Pallas implementation of Node2Vec.forward.

    emb_weight: (N, D) float32   -- self.embedding.weight
    node_feats: (N, F) float32   -- self.node_feats
    lin_w:      (E, F) float32   -- self.lin_node.weight (PyTorch layout)
    lin_b:      (E,)   float32   -- self.lin_node.bias
    batch:      optional int32 index vector
    """
    N, D = emb_weight.shape
    _, F = node_feats.shape
    E = lin_w.shape[0]
    out_w = D + E

    # Batch path: gather only the requested rows BEFORE the kernel, so HBM
    # traffic scales with |batch| instead of N.
    if batch is not None:
        emb_rows = jnp.take(emb_weight, batch, axis=0)
        feat_rows = jnp.take(node_feats, batch, axis=0)
    else:
        emb_rows, feat_rows = emb_weight, node_feats
    R = emb_rows.shape[0]

    if tile_n is None:
        tile_n = _choose_tile_n(R, D, F, out_w)
    tile_n = max(8, (tile_n // 8) * 8)

    # Pad rows to a multiple of the tile (no divisibility assert); the padded
    # tail is dropped after the call.
    Rp = _round_up(R, tile_n)
    if Rp != R:
        pad = Rp - R
        emb_rows = jnp.pad(emb_rows, ((0, pad), (0, 0)))
        feat_rows = jnp.pad(feat_rows, ((0, pad), (0, 0)))

    w_t = lin_w.T.astype(jnp.float32)          # (F, E) for x @ W.T
    b2d = lin_b.reshape(1, E).astype(jnp.float32)

    grid = (Rp // tile_n,)
    cost = pl.CostEstimate(
        flops=2 * Rp * F * E,
        transcendentals=0,
        bytes_accessed=4 * (Rp * (D + F + D + E) + F * E + E),
    )

    out = pl.pallas_call(
        _node2vec_fwd_kernel,
        out_shape=jax.ShapeDtypeStruct((Rp, out_w), jnp.float32),
        grid_spec=pltpu.PrefetchScalarGridSpec(
            num_scalar_prefetch=0,
            grid=grid,
            in_specs=[
                pl.BlockSpec((tile_n, D), lambda i: (i, 0)),   # emb rows
                pl.BlockSpec((tile_n, F), lambda i: (i, 0)),   # node feat rows
                pl.BlockSpec((F, E),      lambda i: (0, 0)),   # W.T (resident)
                pl.BlockSpec((1, E),      lambda i: (0, 0)),   # bias (resident)
            ],
            out_specs=pl.BlockSpec((tile_n, out_w), lambda i: (i, 0)),
        ),
        compiler_params=pltpu.CompilerParams(
            dimension_semantics=("parallel",),
            vmem_limit_bytes=32 * 1024 * 1024),
        cost_estimate=cost,
    )(emb_rows.astype(jnp.float32), feat_rows.astype(jnp.float32), w_t, b2d)

    if Rp != R:
        out = out[:R]
    return out


def _reference(emb_weight, node_feats, lin_w, lin_b, batch=None):
    z = node_feats @ lin_w.T + lin_b
    m = jnp.concatenate([emb_weight, z], axis=1)
    return m if batch is None else m[batch]


if __name__ == "__main__":
    # Small, deterministic synthetic setup consistent with the module:
    #   N nodes, num_node_feats=F, embedding_dim=D, node_feat_embed_dim=E
    N, F, D, E = 64, 16, 32, 32

    key = jax.random.PRNGKey(0)
    k_emb, k_feat, k_w, k_b, k_batch = jax.random.split(key, 5)

    # Embedding.reset_parameters -> N(0, 1)
    emb_weight = jax.random.normal(k_emb, (N, D), dtype=jnp.float32)
    node_feats = jax.random.normal(k_feat, (N, F), dtype=jnp.float32)
    bound_w = (1.0 / F) ** 0.5
    lin_w = jax.random.uniform(k_w, (E, F), minval=-bound_w, maxval=bound_w,
                               dtype=jnp.float32)
    lin_b = jax.random.uniform(k_b, (E,), minval=-bound_w, maxval=bound_w,
                               dtype=jnp.float32)

    # forward(batch=None)
    out_full = node2vec_forward(emb_weight, node_feats, lin_w, lin_b)
    jax.block_until_ready(out_full)

    # forward(batch) variant (only |batch| rows are computed / written)
    batch = jax.random.randint(k_batch, (8,), 0, N, dtype=jnp.int32)
    out_batch = node2vec_forward(emb_weight, node_feats, lin_w, lin_b, batch)
    jax.block_until_ready(out_batch)

    # Ragged node count (exercises the pad + slice path, no divisibility assert)
    N2 = 50
    out_ragged = node2vec_forward(emb_weight[:N2], node_feats[:N2], lin_w, lin_b)
    jax.block_until_ready(out_ragged)

    ref_full = _reference(emb_weight, node_feats, lin_w, lin_b)
    ref_batch = _reference(emb_weight, node_feats, lin_w, lin_b, batch)
    ref_ragged = _reference(emb_weight[:N2], node_feats[:N2], lin_w, lin_b)

    assert out_full.shape == (N, D + E)
    assert out_batch.shape == (8, D + E)
    assert out_ragged.shape == (N2, D + E)
    assert jnp.allclose(out_full, ref_full, atol=1e-5, rtol=1e-5)
    assert jnp.allclose(out_batch, ref_batch, atol=1e-5, rtol=1e-5)
    assert jnp.allclose(out_ragged, ref_ragged, atol=1e-5, rtol=1e-5)

    # TODO(synk): random-walk sampling (pos_sample/neg_sample via torch-cluster),
    # the negative-sampling loss(), and the sklearn logistic-regression test()
    # are training/eval-time utilities outside forward() and are not implemented.

    print("KERNEL_OK")
</pallas_src>

<mosaic_0001>
module attributes {stable_mosaic.version = 11 : i64} {
  func.func @_node2vec_fwd_kernel(%arg0: i32, %arg1: memref<32x32xf32, #tpu.memory_space<vmem>>, %arg2: memref<32x16xf32, #tpu.memory_space<vmem>>, %arg3: memref<16x32xf32, #tpu.memory_space<vmem>>, %arg4: memref<1x32xf32, #tpu.memory_space<vmem>>, %arg5: memref<32x64xf32, #tpu.memory_space<vmem>>) attributes {dimension_semantics = [#tpu.dimension_semantics<parallel>], iteration_bounds = array<i64: 2>, scalar_prefetch = 0 : i64, scratch_operands = 0 : i64, tpu.core_type = #tpu.core_type<tc>, window_params = [{transform_indices = @transform_0, window_bounds = array<i64: 32, 32>}, {transform_indices = @transform_1, window_bounds = array<i64: 32, 16>}, {pipeline_mode = #tpu.pipeline_mode<synchronous>, transform_indices = @transform_2, window_bounds = array<i64: 16, 32>}, {pipeline_mode = #tpu.pipeline_mode<synchronous>, transform_indices = @transform_3, window_bounds = array<i64: 1, 32>}, {transform_indices = @transform_4, window_bounds = array<i64: 32, 64>}]} {
    %c0 = arith.constant 0 : index
    %c0_0 = arith.constant 0 : index
    %0 = vector.load %arg1[%c0, %c0_0] : memref<32x32xf32, #tpu.memory_space<vmem>>, vector<32x32xf32>
    %c0_1 = arith.constant 0 : index
    %c0_2 = arith.constant 0 : index
    %1 = vector.load %arg5[%c0_1, %c0_2] : memref<32x64xf32, #tpu.memory_space<vmem>>, vector<32x32xf32>
    tpu.vector_store %arg5[%c0_1, %c0_2], %0 {strides = array<i32>} : memref<32x64xf32, #tpu.memory_space<vmem>>, vector<32x32xf32>,
    %c0_3 = arith.constant 0 : index
    %c0_4 = arith.constant 0 : index
    %2 = vector.load %arg2[%c0_3, %c0_4] : memref<32x16xf32, #tpu.memory_space<vmem>>, vector<32x16xf32>
    %c0_5 = arith.constant 0 : index
    %c0_6 = arith.constant 0 : index
    %3 = vector.load %arg3[%c0_5, %c0_6] : memref<16x32xf32, #tpu.memory_space<vmem>>, vector<16x32xf32>
    %cst = arith.constant dense<0.000000e+00> : vector<32x32xf32>
    %4 = tpu.matmul %2, %3, %cst {dimension_numbers = #tpu.dot_dimension_numbers<[1], [0], [0], [1], [0, 0, 1, 1], [], []>} : vector<32x16xf32>, vector<16x32xf32>, vector<32x32xf32> -> vector<32x32xf32>
    %c0_7 = arith.constant 0 : index
    %c0_8 = arith.constant 0 : index
    %5 = vector.load %arg4[%c0_7, %c0_8] : memref<1x32xf32, #tpu.memory_space<vmem>>, vector<1x32xf32>
    %6 = vector.broadcast %5 : vector<1x32xf32> to vector<32x32xf32>
    %7 = arith.addf %4, %6 : vector<32x32xf32>
    %c0_9 = arith.constant 0 : index
    %c32 = arith.constant 32 : index
    %8 = vector.load %arg5[%c0_9, %c32] : memref<32x64xf32, #tpu.memory_space<vmem>>, vector<32x32xf32>
    tpu.vector_store %arg5[%c0_9, %c32], %7 {strides = array<i32>} : memref<32x64xf32, #tpu.memory_space<vmem>>, vector<32x32xf32>,
    return
  }
  func.func @transform_0(%arg0: i32) -> (i32, i32) {
    %c0_i32 = arith.constant 0 : i32
    %c0_i32_0 = arith.constant 0 : i32
    return %arg0, %c0_i32 : i32, i32
  }
  func.func @transform_1(%arg0: i32) -> (i32, i32) {
    %c0_i32 = arith.constant 0 : i32
    %c0_i32_0 = arith.constant 0 : i32
    return %arg0, %c0_i32 : i32, i32
  }
  func.func @transform_2(%arg0: i32) -> (i32, i32) {
    %c0_i32 = arith.constant 0 : i32
    %c0_i32_0 = arith.constant 0 : i32
    %c0_i32_1 = arith.constant 0 : i32
    return %c0_i32, %c0_i32_0 : i32, i32
  }
  func.func @transform_3(%arg0: i32) -> (i32, i32) {
    %c0_i32 = arith.constant 0 : i32
    %c0_i32_0 = arith.constant 0 : i32
    %c0_i32_1 = arith.constant 0 : i32
    return %c0_i32, %c0_i32_0 : i32, i32
  }
  func.func @transform_4(%arg0: i32) -> (i32, i32) {
    %c0_i32 = arith.constant 0 : i32
    %c0_i32_0 = arith.constant 0 : i32
    return %arg0, %c0_i32 : i32, i32
  }
}

</mosaic_0001>

<llo_original>
// kernel: tpu_custom_call.1
$region0: #{tpu_custom_call.1}
  #allocation0 [shape = 'u32[]', space=smem, size = 0x4, offset = 0x4, fixed_abs, tag = 'smem constant byte address 0x4 - core index']
  #allocation1 [shape = 'u32[72,128]{1,0:T(1,128)}', space=vmem, size = 0x9000, scoped, tag = 'internal scratch']
  %s0 = inlined_call_operand.vmem [shape: f32[64,32], index: 0, kind: input, shape index: {}]
  %s1 = inlined_call_operand.vmem [shape: f32[64,16], index: 1, kind: input, shape index: {}]
  %s2 = inlined_call_operand.vmem [shape: f32[16,32], index: 2, kind: input, shape index: {}]
  %s3 = inlined_call_operand.vmem [shape: f32[1,32], index: 3, kind: input, shape index: {}]
  %s4 = inlined_call_operand.hbm [shape: f32[64,64], index: 4, kind: output, shape index: {}]
  %s5 = sld [smem:[#allocation0]]
  $region49: #{tpu_custom_call.1} parent=0
    _
  %s7 = ssub.s32 1, %s5
  %s8 = scalar_select 0, %s7, %s5
  $region1: #{tpu_custom_call.1} parent=0
    #allocation2 [shape = 'u8[32768]{0}', space=vmem, size = 0x8000, scoped, tag = 'output window, operand 0']
    #allocation3 [shape = 's32[2]{0}', space=sflag, size = 0x8, scoped, tag = 'scoped memory for tpu_custom_call.1']
    %9 = vsyncpa [#allocation3], 0
    %s10 = scalar_lea.sflag [#allocation3], 1
    %11 = vsyncpa %s10, 0
    loop: start=0, step=1, limit=4
    $region2: #{tpu_custom_call.1} parent=1 // loop_pre_header
      _
    $region3: #{tpu_custom_call.1} parent=1 // loop_header
      %s13 = sphi 0, %s17
      %p14 = scmp.ge.s32.totalorder %s13, 4
      %s23 = sphi 0, %s25
      %s26 = sphi 0, %s23
      %s27 = sphi 0, %s26
      %s43 = sphi 0, %s27
      %s49 = sphi 0, %s51
      %s52 = sphi 0, %s49
      %s53 = sphi 0, %s52
      %s69 = sphi 0, %s53
      %s73 = sphi 0, %s73
      %s75 = sphi 0, %s73
      %s76 = sphi 0, %s75
      %s90 = sphi 0, %s76
      %s94 = sphi 0, %s94
      %s96 = sphi 0, %s94
      %s97 = sphi 0, %s96
      %s111 = sphi 0, %s97
      %s117 = sphi 0, %s119
      %s120 = sphi 0, %s117
      %s121 = sphi 0, %s120
      %s137 = sphi 0, %s121
    $region4: #{tpu_custom_call.1} parent=1 // loop_header_branch
      %16 = sbr.rel (%p14) target = $region8
    $region5: #{tpu_custom_call.1} parent=1 // loop_body
      %s18 = ssub.s32 %s13, 1
      %s19 = ssub.s32 %s13, 2
      %s20 = sadd.s32 %s13, 1
      %s21 = ssub.s32 %s13, %s20
      %p22 = scmp.eq.s32.totalorder %s21, 0
      %s24 = sadd.s32 %s23, 1
      %s25 = scalar_select %p22, %s23, %s24
      %p28 = pneg %p22
      %p29 = scmp.eq.s32.totalorder %s13, 1
      %p30 = por %p28, %p29
      %p31 = scmp.ne.s32.totalorder %s23, %s26
      %p32 = scmp.eq.s32.totalorder %s13, 0
      %p33 = por %p31, %p32
      %p34 = scmp.ne.s32.totalorder %s23, %s26
      %p35 = scmp.eq.s32.totalorder %s18, 1
      %p36 = por %p34, %p35
      %p37 = scmp.ne.s32.totalorder %s26, %s27
      %p38 = scmp.eq.s32.totalorder %s18, 0
      %p39 = por %p37, %p38
      %p40 = scmp.ne.s32.totalorder %s26, %s27
      %p41 = scmp.eq.s32.totalorder %s19, 1
      %p42 = por %p40, %p41
      %p44 = scmp.ne.s32.totalorder %s27, %s43
      %p45 = scmp.eq.s32.totalorder %s19, 0
      %p46 = por %p44, %p45
      %s47 = ssub.s32 %s13, %s20
      %p48 = scmp.eq.s32.totalorder %s47, 0
      %s50 = sadd.s32 %s49, 1
      %s51 = scalar_select %p48, %s49, %s50
      %p54 = pneg %p48
      %p55 = scmp.eq.s32.totalorder %s13, 1
      %p56 = por %p54, %p55
      %p57 = scmp.ne.s32.totalorder %s49, %s52
      %p58 = scmp.eq.s32.totalorder %s13, 0
      %p59 = por %p57, %p58
      %p60 = scmp.ne.s32.totalorder %s49, %s52
      %p61 = scmp.eq.s32.totalorder %s18, 1
      %p62 = por %p60, %p61
      %p63 = scmp.ne.s32.totalorder %s52, %s53
      %p64 = scmp.eq.s32.totalorder %s18, 0
      %p65 = por %p63, %p64
      %p66 = scmp.ne.s32.totalorder %s52, %s53
      %p67 = scmp.eq.s32.totalorder %s19, 1
      %p68 = por %p66, %p67
      %p70 = scmp.ne.s32.totalorder %s53, %s69
      %p71 = scmp.eq.s32.totalorder %s19, 0
      %p72 = por %p70, %p71
      %s74 = sadd.s32 %s73, 1
      %p77 = scmp.eq.s32.totalorder %s13, 1
      %p78 = scmp.ne.s32.totalorder %s73, %s75
      %p79 = scmp.eq.s32.totalorder %s13, 0
      %p80 = por %p78, %p79
      %p81 = scmp.ne.s32.totalorder %s73, %s75
      %p82 = scmp.eq.s32.totalorder %s18, 1
      %p83 = por %p81, %p82
      %p84 = scmp.ne.s32.totalorder %s75, %s76
      %p85 = scmp.eq.s32.totalorder %s18, 0
      %p86 = por %p84, %p85
      %p87 = scmp.ne.s32.totalorder %s75, %s76
      %p88 = scmp.eq.s32.totalorder %s19, 1
      %p89 = por %p87, %p88
      %p91 = scmp.ne.s32.totalorder %s76, %s90
      %p92 = scmp.eq.s32.totalorder %s19, 0
      %p93 = por %p91, %p92
      %s95 = sadd.s32 %s94, 1
      %p98 = scmp.eq.s32.totalorder %s13, 1
      %p99 = scmp.ne.s32.totalorder %s94, %s96
      %p100 = scmp.eq.s32.totalorder %s13, 0
      %p101 = por %p99, %p100
      %p102 = scmp.ne.s32.totalorder %s94, %s96
      %p103 = scmp.eq.s32.totalorder %s18, 1
      %p104 = por %p102, %p103
      %p105 = scmp.ne.s32.totalorder %s96, %s97
      %p106 = scmp.eq.s32.totalorder %s18, 0
      %p107 = por %p105, %p106
      %p108 = scmp.ne.s32.totalorder %s96, %s97
      %p109 = scmp.eq.s32.totalorder %s19, 1
      %p110 = por %p108, %p109
      %p112 = scmp.ne.s32.totalorder %s97, %s111
      %p113 = scmp.eq.s32.totalorder %s19, 0
      %p114 = por %p112, %p113
      %s115 = ssub.s32 %s13, %s20
      %p116 = scmp.eq.s32.totalorder %s115, 0
      %s118 = sadd.s32 %s117, 1
      %s119 = scalar_select %p116, %s117, %s118
      %p122 = pneg %p116
      %p123 = scmp.eq.s32.totalorder %s13, 1
      %p124 = por %p122, %p123
      %p125 = scmp.ne.s32.totalorder %s117, %s120
      %p126 = scmp.eq.s32.totalorder %s13, 0
      %p127 = por %p125, %p126
      %p128 = scmp.ne.s32.totalorder %s117, %s120
      %p129 = scmp.eq.s32.totalorder %s18, 1
      %p130 = por %p128, %p129
      %p131 = scmp.ne.s32.totalorder %s120, %s121
      %p132 = scmp.eq.s32.totalorder %s18, 0
      %p133 = por %p131, %p132
      %p134 = scmp.ne.s32.totalorder %s120, %s121
      %p135 = scmp.eq.s32.totalorder %s19, 1
      %p136 = por %p134, %p135
      %p138 = scmp.ne.s32.totalorder %s121, %s137
      %p139 = scmp.eq.s32.totalorder %s19, 0
      %p140 = por %p138, %p139
      %p141 = scmp.le.s32.totalorder 1, %s13
      %p142 = scmp.lt.s32.totalorder %s13, 3
      %p143 = pnand %p141, %p142
      %p144 = pneg %p143
      // Predicated region
      $region9: #{tpu_custom_call.1} parent=5 // pred_check
        _
      $region10: #{tpu_custom_call.1} parent=5 // pred_check_branch
        %146 = sbr.rel (%p143) target = $region12
      $region11: #{tpu_custom_call.1} parent=5 // pred_region
        %s147 = ssub.s32 %s13, 1
        // Predicated region
        $region13: #{tpu_custom_call.1} parent=11 // pred_check
          %p148 = pneg %p86
        $region14: #{tpu_custom_call.1} parent=11 // pred_check_branch
          %150 = sbr.rel (%p148) target = $region16
        $region15: #{tpu_custom_call.1} parent=11 // pred_region
          _
        $region16: #{tpu_custom_call.1} parent=11 // pred_fallthru
          _
        // Predicated region
        $region17: #{tpu_custom_call.1} parent=11 // pred_check
          %p151 = pneg %p107
        $region18: #{tpu_custom_call.1} parent=11 // pred_check_branch
          %153 = sbr.rel (%p151) target = $region20
        $region19: #{tpu_custom_call.1} parent=11 // pred_region
          _
        $region20: #{tpu_custom_call.1} parent=11 // pred_fallthru
          _
      $region12: #{tpu_custom_call.1} parent=5 // pred_fallthru
        _
      %p154 = scmp.lt.s32.totalorder %s13, 2
      // Predicated region
      $region21: #{tpu_custom_call.1} parent=5 // pred_check
        %p155 = pneg %p154
      $region22: #{tpu_custom_call.1} parent=5 // pred_check_branch
        %157 = sbr.rel (%p155) target = $region24
      $region23: #{tpu_custom_call.1} parent=5 // pred_region
        // Predicated region
        $region25: #{tpu_custom_call.1} parent=23 // pred_check
          %p158 = pneg %p33
        $region26: #{tpu_custom_call.1} parent=23 // pred_check_branch
          %160 = sbr.rel (%p158) target = $region28
        $region27: #{tpu_custom_call.1} parent=23 // pred_region
          %s161 = smul.u32 4, %s13
          %p162 = scmp.lt.s32.totalorder %s161, 7
          %s163 = scalar_select %p162, %s161, 7
          %s164 = smul.addr %s163, 8
          %s165 = scalar_lea.vmem %s0, %s164
          %s166 = smul.u32 4, %s13
        $region28: #{tpu_custom_call.1} parent=23 // pred_fallthru
          _
        // Predicated region
        $region29: #{tpu_custom_call.1} parent=23 // pred_check
          %p167 = pneg %p59
        $region30: #{tpu_custom_call.1} parent=23 // pred_check_branch
          %169 = sbr.rel (%p167) target = $region32
        $region31: #{tpu_custom_call.1} parent=23 // pred_region
          %s170 = smul.u32 4, %s13
          %p171 = scmp.lt.s32.totalorder %s170, 7
          %s172 = scalar_select %p171, %s170, 7
          %s173 = smul.addr %s172, 8
          %s174 = scalar_lea.vmem %s1, %s173
          %s175 = smul.u32 4, %s13
        $region32: #{tpu_custom_call.1} parent=23 // pred_fallthru
          _
      $region24: #{tpu_custom_call.1} parent=5 // pred_fallthru
        _
      %p176 = scmp.le.s32.totalorder 1, %s13
      %p177 = scmp.lt.s32.totalorder %s13, 3
      %p178 = pnand %p176, %p177
      %p179 = pneg %p178
      // Predicated region
      $region33: #{tpu_custom_call.1} parent=5 // pred_check
        _
      $region34: #{tpu_custom_call.1} parent=5 // pred_check_branch
        %181 = sbr.rel (%p178) target = $region36
      $region35: #{tpu_custom_call.1} parent=5 // pred_region
        %s182 = ssub.s32 %s13, 1
        %s183 = smul.u32 4, %s18
        %p184 = scmp.lt.s32.totalorder %s183, 7
        %s185 = scalar_select %p184, %s183, 7
        %s186 = smul.addr %s185, 8
        %s187 = scalar_lea.vmem %s0, %s186
        %p188 = pneg %p39
        %p189 = pneg %p36
        %s190 = smul.u32 4, %s18
        %p191 = scmp.lt.s32.totalorder %s190, 7
        %s192 = scalar_select %p191, %s190, 7
        %s193 = smul.addr %s192, 8
        %s194 = scalar_lea.vmem %s1, %s193
        %p195 = pneg %p65
        %p196 = pneg %p62
        %p197 = pneg %p86
        %p198 = pneg %p83
        %p199 = pneg %p107
        %p200 = pneg %p104
        %p201 = pneg %p133
        %p202 = pneg %p130
        %s203 = sand.u32 %s120, 1
        %s204 = scalar_lea.sflag [#allocation3], %s203
        %s205 = sand.u32 %s120, 1
        %s206 = smul.addr %s205, 32
        %s207 = scalar_lea.vmem [#allocation2], %s206
        %s208 = smul.u32 4, %s18
        %p209 = scmp.lt.s32.totalorder %s208, 7
        %s210 = scalar_select %p209, %s208, 7
        %s211 = smul.addr %s210, 8
        %s212 = scalar_lea.vmem %s0, %s211
        %s213 = smul.u32 4, %s18
        %s214 = smul.u32 4, %s18
        %p215 = scmp.lt.s32.totalorder %s214, 7
        %s216 = scalar_select %p215, %s214, 7
        %s217 = smul.addr %s216, 8
        %s218 = scalar_lea.vmem %s1, %s217
        %s219 = smul.u32 4, %s18
        %s220 = smul.u32 4, %s18
        %v221 = vld [vmem:[%s212] sm:$0xff]
        %v222 = vld [vmem:[%s212 + $0x8] sm:$0xff]
        %v223 = vld [vmem:[%s212 + $0x10] sm:$0xff]
        %v224 = vld [vmem:[%s212 + $0x18] sm:$0xff]
        %vm225 = vcmask 261120
        %226 = vst.msk [vmem:[%s207] sm:$0xff] %vm225, %v221
        %227 = vst.msk [vmem:[%s207 + $0x8] sm:$0xff] %vm225, %v222
        %228 = vst.msk [vmem:[%s207 + $0x10] sm:$0xff] %vm225, %v223
        %229 = vst.msk [vmem:[%s207 + $0x18] sm:$0xff] %vm225, %v224
        %v230 = vld [vmem:[%s218] sm:$0xff]
        %v231 = vld [vmem:[%s218 + $0x8] sm:$0xff]
        %v232 = vld [vmem:[%s218 + $0x10] sm:$0xff]
        %v233 = vld [vmem:[%s218 + $0x18] sm:$0xff]
        %v234 = vld [vmem:[%s2] sm:$0xff]
        %v235 = vld [vmem:[%s2 + $0x8] sm:$0xff]
        %v236 = vld [vmem:[%s3] sm:$0x1]
        %v238 = vperm.slane %v236, 0
        %vm240 = vcmask 130048
        %v242 = vsel %vm240, %v230, 0
        %v245 = vsel %vm240, %v231, 0
        %v248 = vsel %vm240, %v232, 0
        %v251 = vsel %vm240, %v233, 0
        %253 = vmatpush.msra.mxu0 0.0
        %254 = vmatpush.msra.mxu0 0.0
        %255 = vmatpush.msra.mxu0 0.0
        %256 = vmatpush.msra.mxu0 0.0
        %257 = vmatpush.msra.mxu0 0.0
        %258 = vmatpush.msra.mxu0 0.0
        %259 = vmatpush.msra.mxu0 0.0
        %260 = vmatpush.msra.mxu0 0.0
        %261 = vmatpush.msra.mxu0 0.0
        %262 = vmatpush.msra.mxu0 0.0
        %263 = vmatpush.msra.mxu0 0.0
        %264 = vmatpush.msra.mxu0 0.0
        %265 = vmatpush.msra.mxu0 0.0
        %266 = vmatpush.msra.mxu0 0.0
        %267 = vmatpush.msra.mxu0 %v235
        %268 = vmatpush.msra.mxu0 %v234
        %269 = vmatmul.f32.gmra.mxu0 %v242
        %v270 = vpop.f32.mrf.mxu0
        %v271 = vadd.f32 %v238, %v270
        %272 = vmatmul.f32.gmra.mxu0 %v245
        %v273 = vpop.f32.mrf.mxu0
        %v274 = vadd.f32 %v238, %v273
        %275 = vmatmul.f32.gmra.mxu0 %v248
        %v276 = vpop.f32.mrf.mxu0
        %v277 = vadd.f32 %v238, %v276
        %278 = vmatmul.f32.gmra.mxu0 %v251
        %v279 = vpop.f32.mrf.mxu0
        %v280 = vadd.f32 %v238, %v279
        %281 = vdwg.mxu0
        %286 = vrot.lane.b32.xlu0 %v271, 32
        %v287 = vpop.permute.xlu0 %286
        %288 = vrot.lane.b32.xlu0 %v274, 32
        %v289 = vpop.permute.xlu0 %288
        %290 = vrot.lane.b32.xlu0 %v277, 32
        %v291 = vpop.permute.xlu0 %290
        %292 = vrot.lane.b32.xlu0 %v280, 32
        %v293 = vpop.permute.xlu0 %292
        %vm298 = vcmask 523520
        %299 = vst.msk [vmem:[%s207] sm:$0xff] %vm298, %v287
        %300 = vst.msk [vmem:[%s207 + $0x8] sm:$0xff] %vm298, %v289
        %301 = vst.msk [vmem:[%s207 + $0x10] sm:$0xff] %vm298, %v291
        %302 = vst.msk [vmem:[%s207 + $0x18] sm:$0xff] %vm298, %v293
        %s303 = sand.u32 %s120, 1
        %s304 = scalar_lea.sflag [#allocation3], %s303
        %s305 = sand.u32 %s120, 1
        %s306 = smul.addr %s305, 32
        %s307 = scalar_lea.vmem [#allocation2], %s306
        // Predicated region
        $region37: #{tpu_custom_call.1} parent=35 // pred_check
          %p308 = pneg %p130
        $region38: #{tpu_custom_call.1} parent=35 // pred_check_branch
          %310 = sbr.rel (%p308) target = $region40
        $region39: #{tpu_custom_call.1} parent=35 // pred_region
          %s311 = smul.u32 4, %s18
          %313 = vsyncadd %s304, 0
          %s314 = smul.addr %s311, 8
          %s315 = scalar_lea.hbm %s4, %s314
          %s316 = sshll.u32 %s307, 4
          %s317 = int_to_ptr.vmem [resolvable:$true] %s316
          %s318 = sshll.u32 %s315, 4
          %s319 = int_to_ptr.hbm [resolvable:$true] %s318
          %324 = dma.vmem_to_hbm [thread:$0]  %s317, 512, %s319, %s304, 128, 128, 8
        $region40: #{tpu_custom_call.1} parent=35 // pred_fallthru
          _
      $region36: #{tpu_custom_call.1} parent=5 // pred_fallthru
        _
      %p325 = scmp.le.s32.totalorder 2, %s13
      // Predicated region
      $region41: #{tpu_custom_call.1} parent=5 // pred_check
        %p326 = pneg %p325
      $region42: #{tpu_custom_call.1} parent=5 // pred_check_branch
        %328 = sbr.rel (%p326) target = $region44
      $region43: #{tpu_custom_call.1} parent=5 // pred_region
        %s329 = ssub.s32 %s13, 2
        // Predicated region
        $region45: #{tpu_custom_call.1} parent=43 // pred_check
          %p330 = pneg %p136
        $region46: #{tpu_custom_call.1} parent=43 // pred_check_branch
          %332 = sbr.rel (%p330) target = $region48
        $region47: #{tpu_custom_call.1} parent=43 // pred_region
          %s333 = sand.u32 %s121, 1
          %s334 = scalar_lea.sflag [#allocation3], %s333
          %s335 = sand.u32 %s121, 1
          %s336 = smul.addr %s335, 32
          %s337 = scalar_lea.vmem [#allocation2], %s336
          %339 = dma.done %s334, 512
        $region48: #{tpu_custom_call.1} parent=43 // pred_fallthru
          _
      $region44: #{tpu_custom_call.1} parent=5 // pred_fallthru
        _
    $region6: #{tpu_custom_call.1} parent=1 // loop_footer
      %s17 = sadd.s32 1, %s13
    $region7: #{tpu_custom_call.1} parent=1 // loop_footer_branch
      %12 = sbr.rel target = $region3
    $region8: #{tpu_custom_call.1} parent=1 // loop_exit
      _
    %340 = vsyncpa [#allocation3], 1
    %s341 = scalar_lea.sflag [#allocation3], 1
    %342 = vsyncpa %s341, 1

</llo_original>
